<compile_context>
chip_gen: v7x
topology: tpu7x:2x2x1
jax: 0.10.0
libtpu: 0.0.40
codegen_flags: <defaults>
</compile_context>

<pallas_src>
import functools

import jax
import jax.numpy as jnp
from jax import lax
from jax.experimental import pallas as pl
from jax.experimental.pallas import tpu as pltpu


def _genkernel_body(x_ref, m_ref, w1_ref, b1_ref, w2_ref, b2_ref, out_ref,
                    *, shifts, B, HW, eps):
    # x_ref : (B, C, HW)    B images; channels on sublanes, pixels on lanes
    # m_ref : (9, B*HW)     border masks per tap, tiled across the B images
    # w1_ref: (C, 9*C)      conv1 weights (BN scale folded), rows = out ch
    # b1_ref: (C, 1)        conv1 folded BN bias
    # w2_ref: (K, 9*C)      conv2 weights (BN scale folded), K = pk*pk - 1
    # b2_ref: (K, 1)        conv2 folded BN bias
    # out   : (B, pk*pk, HW)
    C = x_ref.shape[1]
    K = w2_ref.shape[0]

    # Lay the B images of this block side by side on the lane axis: (C, B*HW).
    if B > 1:
        x_flat = jnp.concatenate([x_ref[b] for b in range(B)], axis=1)
    else:
        x_flat = x_ref[0]

    def im2col(img):
        # img: (Cin, B*HW) -> (9*Cin, B*HW); row order (ky, kx, cin) matches w*_ref.
        parts = []
        for t, shift in enumerate(shifts):
            if shift == 0:                       # center tap: mask is all-ones
                parts.append(img)
                continue
            rolled = pltpu.roll(img, shift, axis=1)   # single XLU lane rotate
            parts.append(rolled * m_ref[t:t + 1, :])  # zero out-of-image taps
        return jnp.concatenate(parts, axis=0)

    # conv1 (3x3 SAME, C -> C): one MXU matmul, folded BN bias + ReLU.
    h1 = jnp.dot(w1_ref[...], im2col(x_flat), preferred_element_type=jnp.float32)
    h1 = jnp.maximum(h1 + b1_ref[...], 0.0)

    # conv2 (3x3 SAME, C -> K): one MXU matmul, folded BN bias, Identity act.
    wgt = jnp.dot(w2_ref[...], im2col(h1), preferred_element_type=jnp.float32)
    wgt = wgt + b2_ref[...]

    # GenKernel normalization; channel axis = sublane axis (axis 0).
    denom = jnp.sum(jnp.abs(wgt), axis=0, keepdims=True) + eps        # (1, B*HW)
    sraw = jnp.sum(wgt, axis=0, keepdims=True)                        # (1, B*HW)
    inv = pl.reciprocal(denom, approx=True)
    inv = inv * (2.0 - denom * inv)            # one Newton step -> ~f32 accuracy
    wgt_n = wgt * inv
    mid = 1.0 - sraw * inv                     # == 1 - sum of normalized weights

    # Per-image lane slice + direct sublane slice stores (no concatenate).
    half = K // 2
    for b in range(B):
        sl = slice(b * HW, (b + 1) * HW)
        out_ref[b, :half, :] = wgt_n[:half, sl]
        out_ref[b, half:half + 1, :] = mid[:, sl]
        out_ref[b, half + 1:, :] = wgt_n[half:, sl]


def _pick_block_batch(N, C, K, pk2, HW, *, max_unroll=16, vmem_budget=12 << 20):
    """Images per grid step: VMEM-bounded, <= max_unroll, divides N, grid >= 2."""
    # Rough f32 working set per image in a block: x(+dbl buf), out(+dbl buf),
    # masks, x_flat, two im2col patches (9C each), h1, wgt + wgt_n.
    per_img = HW * 4 * (2 * C + 2 * pk2 + 9 + C + 18 * C + C + 2 * K)
    cap = max(1, min(max_unroll, vmem_budget // max(per_img, 1)))
    if N >= 2:
        cap = min(cap, max(1, N // 2))   # keep >= 2 grid steps for v7x's two TCs
    for b in range(cap, 0, -1):
        if N % b == 0:
            return b
    return 1


def gen_kernel_forward(x_nchw, params, *, pk, eps=1e-6):
    """GenKernel forward. x_nchw: (N, C, H, W) -> (N, pk*pk, H, W)."""
    w1, s1, b1, w2, s2, b2 = params           # conv weights HWIO, BN as (1, C)/(1, K)
    N, C, H, W = x_nchw.shape
    K = pk * pk - 1
    HW = H * W
    B = _pick_block_batch(N, C, K, pk * pk, HW)
    L = B * HW

    # Free layout change only: NCHW is already (N, C, H*W).
    x = x_nchw.reshape(N, C, HW).astype(jnp.float32)

    # Matmul-ready weights (C_out, 9*C_in) with BN scale folded into the rows.
    w1m = jnp.transpose(w1.reshape(9 * C, C)) * s1.reshape(C, 1)       # (C, 9C)
    w2m = jnp.transpose(w2.reshape(9 * C, K)) * s2.reshape(K, 1)       # (K, 9C)
    b1c = b1.reshape(C, 1).astype(jnp.float32)
    b2c = b2.reshape(K, 1).astype(jnp.float32)

    # Static lane shifts + precomputed border masks (tap order ky, kx), tiled
    # across the B images of a block.  The masks also zero exactly the lanes
    # that would wrap into a neighbouring image after the full-slab roll.
    pix = jnp.arange(HW, dtype=jnp.int32)
    yi, xi = pix // W, pix % W
    shifts, masks = [], []
    for oy in (-1, 0, 1):
        for ox in (-1, 0, 1):
            shifts.append(int((-(oy * W + ox)) % L))
            masks.append((yi >= -oy) & (yi < H - oy) & (xi >= -ox) & (xi < W - ox))
    masks = jnp.tile(jnp.stack(masks, axis=0).astype(jnp.float32), (1, B))  # (9, L)

    out = pl.pallas_call(
        functools.partial(_genkernel_body, shifts=tuple(shifts), B=B, HW=HW, eps=eps),
        out_shape=jax.ShapeDtypeStruct((N, pk * pk, HW), jnp.float32),
        grid=(N // B,),
        in_specs=[
            pl.BlockSpec((B, C, HW), lambda n: (n, 0, 0)),
            pl.BlockSpec((9, L), lambda n: (0, 0)),       # resident constants
            pl.BlockSpec((C, 9 * C), lambda n: (0, 0)),
            pl.BlockSpec((C, 1), lambda n: (0, 0)),
            pl.BlockSpec((K, 9 * C), lambda n: (0, 0)),
            pl.BlockSpec((K, 1), lambda n: (0, 0)),
        ],
        out_specs=pl.BlockSpec((B, pk * pk, HW), lambda n: (n, 0, 0)),
        compiler_params=pltpu.CompilerParams(
            dimension_semantics=("parallel",),
            vmem_limit_bytes=32 * 1024 * 1024),
    )(x, masks, w1m, b1c, w2m, b2c)

    return out.reshape(N, pk * pk, H, W)      # free reshape, no transpose


def init_params(key, in_channels, pk):
    """Deterministic synthetic parameters (conv weights HWIO + folded BN)."""
    C, K = in_channels, pk * pk - 1
    k1, k2, k3, k4 = jax.random.split(key, 4)
    fan_in = 3 * 3 * C
    w1 = jax.random.normal(k1, (3, 3, C, C), jnp.float32) * (1.0 / fan_in) ** 0.5
    w2 = jax.random.normal(k2, (3, 3, C, K), jnp.float32) * (1.0 / fan_in) ** 0.5

    bn_eps = 1e-5
    gamma1 = 1.0 + 0.1 * jax.random.normal(k3, (C,), jnp.float32)
    beta1 = 0.05 * jnp.arange(C, dtype=jnp.float32)
    mean1 = jnp.zeros((C,), jnp.float32)
    var1 = jnp.ones((C,), jnp.float32)
    s1 = (gamma1 / jnp.sqrt(var1 + bn_eps)).reshape(1, C)
    b1 = (beta1 - mean1 * s1[0]).reshape(1, C)

    gamma2 = 1.0 + 0.1 * jax.random.normal(k4, (K,), jnp.float32)
    beta2 = 0.02 * jnp.arange(K, dtype=jnp.float32)
    mean2 = jnp.zeros((K,), jnp.float32)
    var2 = jnp.ones((K,), jnp.float32)
    s2 = (gamma2 / jnp.sqrt(var2 + bn_eps)).reshape(1, K)
    b2 = (beta2 - mean2 * s2[0]).reshape(1, K)
    return (w1, s1, b1, w2, s2, b2)


def reference_forward(x_nchw, params, *, pk, eps=1e-6):
    """Pure-JAX reference (mirrors the PyTorch module, inference-mode BN)."""
    w1, s1, b1, w2, s2, b2 = params
    x = jnp.transpose(x_nchw, (0, 2, 3, 1)).astype(jnp.float32)
    dn = ('NHWC', 'HWIO', 'NHWC')
    h = lax.conv_general_dilated(x, w1, (1, 1), 'SAME', dimension_numbers=dn)
    h = jnp.maximum(h * s1.reshape(1, 1, 1, -1) + b1.reshape(1, 1, 1, -1), 0.0)
    wgt = lax.conv_general_dilated(h, w2, (1, 1), 'SAME', dimension_numbers=dn)
    wgt = wgt * s2.reshape(1, 1, 1, -1) + b2.reshape(1, 1, 1, -1)
    wsum = jnp.sum(jnp.abs(wgt), axis=-1, keepdims=True)
    wgt = wgt / (wsum + eps)
    wmid = 1.0 - jnp.sum(wgt, axis=-1, keepdims=True)
    K = wgt.shape[-1]
    full = jnp.concatenate([wgt[..., :K // 2], wmid, wgt[..., K // 2:]], axis=-1)
    return jnp.transpose(full, (0, 3, 1, 2))


if __name__ == "__main__":
    N, C, H, W = 2, 8, 16, 16
    pk = 3

    key = jax.random.PRNGKey(0)
    kx, kp = jax.random.split(key)
    x = jax.random.normal(kx, (N, C, H, W), jnp.float32)
    params = init_params(kp, C, pk)

    fwd = jax.jit(functools.partial(gen_kernel_forward, pk=pk))
    out = jax.block_until_ready(fwd(x, params))

    ref = jax.block_until_ready(reference_forward(x, params, pk=pk))
    assert out.shape == (N, pk * pk, H, W), out.shape

    # Structural invariant (precision-independent): channel sums are exactly 1.
    assert jnp.allclose(jnp.sum(out, axis=1), 1.0, atol=1e-4), (
        f"channel-sum max err {float(jnp.max(jnp.abs(jnp.sum(out, axis=1) - 1.0)))}")

    # Kernel and reference both run the convs at TPU-default MXU precision;
    # residual differences stem only from contraction ordering (im2col matmul
    # vs XLA conv), so 1e-2 on the O(1)-scale output is conservative.
    assert jnp.allclose(out, ref, rtol=1e-2, atol=1e-2), (
        f"max abs diff {float(jnp.max(jnp.abs(out - ref)))}")

    print("KERNEL_OK")
</pallas_src>

<mosaic_0001>
module attributes {stable_mosaic.version = 11 : i64} {
  func.func @_genkernel_body(%arg0: i32, %arg1: memref<1x8x256xf32, #tpu.memory_space<vmem>>, %arg2: memref<9x256xf32, #tpu.memory_space<vmem>>, %arg3: memref<8x72xf32, #tpu.memory_space<vmem>>, %arg4: memref<8x1xf32, #tpu.memory_space<vmem>>, %arg5: memref<8x72xf32, #tpu.memory_space<vmem>>, %arg6: memref<8x1xf32, #tpu.memory_space<vmem>>, %arg7: memref<1x9x256xf32, #tpu.memory_space<vmem>>) attributes {dimension_semantics = [#tpu.dimension_semantics<parallel>], iteration_bounds = array<i64: 2>, scalar_prefetch = 0 : i64, scratch_operands = 0 : i64, tpu.core_type = #tpu.core_type<tc>, window_params = [{transform_indices = @transform_0, window_bounds = array<i64: 1, 8, 256>}, {pipeline_mode = #tpu.pipeline_mode<synchronous>, transform_indices = @transform_1, window_bounds = array<i64: 9, 256>}, {pipeline_mode = #tpu.pipeline_mode<synchronous>, transform_indices = @transform_2, window_bounds = array<i64: 8, 72>}, {pipeline_mode = #tpu.pipeline_mode<synchronous>, transform_indices = @transform_3, window_bounds = array<i64: 8, 1>}, {pipeline_mode = #tpu.pipeline_mode<synchronous>, transform_indices = @transform_4, window_bounds = array<i64: 8, 72>}, {pipeline_mode = #tpu.pipeline_mode<synchronous>, transform_indices = @transform_5, window_bounds = array<i64: 8, 1>}, {transform_indices = @transform_6, window_bounds = array<i64: 1, 9, 256>}]} {
    %c0 = arith.constant 0 : index
    %c0_0 = arith.constant 0 : index
    %c0_1 = arith.constant 0 : index
    %0 = vector.load %arg1[%c0, %c0_0, %c0_1] : memref<1x8x256xf32, #tpu.memory_space<vmem>>, vector<1x8x256xf32>
    %1 = vector.shape_cast %0 : vector<1x8x256xf32> to vector<8x256xf32>
    %c0_2 = arith.constant 0 : index
    %c0_3 = arith.constant 0 : index
    %2 = vector.load %arg3[%c0_2, %c0_3] : memref<8x72xf32, #tpu.memory_space<vmem>>, vector<8x72xf32>
    %c17_i32 = arith.constant 17 : i32
    %3 = tpu.dynamic_rotate %1 by %c17_i32 dim 1 : vector<8x256xf32>, i32 -> vector<8x256xf32>
    %c0_4 = arith.constant 0 : index
    %c0_5 = arith.constant 0 : index
    %4 = vector.load %arg2[%c0_4, %c0_5] : memref<9x256xf32, #tpu.memory_space<vmem>>, vector<1x256xf32>
    %5 = vector.broadcast %4 : vector<1x256xf32> to vector<8x256xf32>
    %6 = arith.mulf %3, %5 : vector<8x256xf32>
    %c16_i32 = arith.constant 16 : i32
    %7 = tpu.dynamic_rotate %1 by %c16_i32 dim 1 : vector<8x256xf32>, i32 -> vector<8x256xf32>
    %c1 = arith.constant 1 : index
    %c0_6 = arith.constant 0 : index
    %8 = vector.load %arg2[%c1, %c0_6] : memref<9x256xf32, #tpu.memory_space<vmem>>, vector<1x256xf32>
    %9 = vector.broadcast %8 : vector<1x256xf32> to vector<8x256xf32>
    %10 = arith.mulf %7, %9 : vector<8x256xf32>
    %c15_i32 = arith.constant 15 : i32
    %11 = tpu.dynamic_rotate %1 by %c15_i32 dim 1 : vector<8x256xf32>, i32 -> vector<8x256xf32>
    %c2 = arith.constant 2 : index
    %c0_7 = arith.constant 0 : index
    %12 = vector.load %arg2[%c2, %c0_7] : memref<9x256xf32, #tpu.memory_space<vmem>>, vector<1x256xf32>
    %13 = vector.broadcast %12 : vector<1x256xf32> to vector<8x256xf32>
    %14 = arith.mulf %11, %13 : vector<8x256xf32>
    %c1_i32 = arith.constant 1 : i32
    %15 = tpu.dynamic_rotate %1 by %c1_i32 dim 1 : vector<8x256xf32>, i32 -> vector<8x256xf32>
    %c3 = arith.constant 3 : index
    %c0_8 = arith.constant 0 : index
    %16 = vector.load %arg2[%c3, %c0_8] : memref<9x256xf32, #tpu.memory_space<vmem>>, vector<1x256xf32>
    %17 = vector.broadcast %16 : vector<1x256xf32> to vector<8x256xf32>
    %18 = arith.mulf %15, %17 : vector<8x256xf32>
    %c255_i32 = arith.constant 255 : i32
    %19 = tpu.dynamic_rotate %1 by %c255_i32 dim 1 : vector<8x256xf32>, i32 -> vector<8x256xf32>
    %c5 = arith.constant 5 : index
    %c0_9 = arith.constant 0 : index
    %20 = vector.load %arg2[%c5, %c0_9] : memref<9x256xf32, #tpu.memory_space<vmem>>, vector<1x256xf32>
    %21 = vector.broadcast %20 : vector<1x256xf32> to vector<8x256xf32>
    %22 = arith.mulf %19, %21 : vector<8x256xf32>
    %c241_i32 = arith.constant 241 : i32
    %23 = tpu.dynamic_rotate %1 by %c241_i32 dim 1 : vector<8x256xf32>, i32 -> vector<8x256xf32>
    %c6 = arith.constant 6 : index
    %c0_10 = arith.constant 0 : index
    %24 = vector.load %arg2[%c6, %c0_10] : memref<9x256xf32, #tpu.memory_space<vmem>>, vector<1x256xf32>
    %25 = vector.broadcast %24 : vector<1x256xf32> to vector<8x256xf32>
    %26 = arith.mulf %23, %25 : vector<8x256xf32>
    %c240_i32 = arith.constant 240 : i32
    %27 = tpu.dynamic_rotate %1 by %c240_i32 dim 1 : vector<8x256xf32>, i32 -> vector<8x256xf32>
    %c7 = arith.constant 7 : index
    %c0_11 = arith.constant 0 : index
    %28 = vector.load %arg2[%c7, %c0_11] : memref<9x256xf32, #tpu.memory_space<vmem>>, vector<1x256xf32>
    %29 = vector.broadcast %28 : vector<1x256xf32> to vector<8x256xf32>
    %30 = arith.mulf %27, %29 : vector<8x256xf32>
    %c239_i32 = arith.constant 239 : i32
    %31 = tpu.dynamic_rotate %1 by %c239_i32 dim 1 : vector<8x256xf32>, i32 -> vector<8x256xf32>
    %c8 = arith.constant 8 : index
    %c0_12 = arith.constant 0 : index
    %32 = vector.load %arg2[%c8, %c0_12] : memref<9x256xf32, #tpu.memory_space<vmem>>, vector<1x256xf32>
    %33 = vector.broadcast %32 : vector<1x256xf32> to vector<8x256xf32>
    %34 = arith.mulf %31, %33 : vector<8x256xf32>
    %35 = tpu.concatenate %6, %10, %14, %18, %1, %22, %26, %30, %34 in 0 : vector<8x256xf32>, vector<8x256xf32>, vector<8x256xf32>, vector<8x256xf32>, vector<8x256xf32>, vector<8x256xf32>, vector<8x256xf32>, vector<8x256xf32>, vector<8x256xf32> -> vector<72x256xf32>
    %cst = arith.constant dense<0.000000e+00> : vector<8x256xf32>
    %36 = tpu.matmul %2, %35, %cst {dimension_numbers = #tpu.dot_dimension_numbers<[1], [0], [0], [1], [0, 0, 1, 1], [], []>} : vector<8x72xf32>, vector<72x256xf32>, vector<8x256xf32> -> vector<8x256xf32>
    %c0_13 = arith.constant 0 : index
    %c0_14 = arith.constant 0 : index
    %37 = vector.load %arg4[%c0_13, %c0_14] : memref<8x1xf32, #tpu.memory_space<vmem>>, vector<8x1xf32>
    %38 = vector.broadcast %37 : vector<8x1xf32> to vector<8x256xf32>
    %39 = arith.addf %36, %38 : vector<8x256xf32>
    %cst_15 = arith.constant 0.000000e+00 : f32
    %40 = vector.broadcast %cst_15 : f32 to vector<8x256xf32>
    %41 = arith.maximumf %39, %40 : vector<8x256xf32>
    %c0_16 = arith.constant 0 : index
    %c0_17 = arith.constant 0 : index
    %42 = vector.load %arg5[%c0_16, %c0_17] : memref<8x72xf32, #tpu.memory_space<vmem>>, vector<8x72xf32>
    %c17_i32_18 = arith.constant 17 : i32
    %43 = tpu.dynamic_rotate %41 by %c17_i32_18 dim 1 : vector<8x256xf32>, i32 -> vector<8x256xf32>
    %c0_19 = arith.constant 0 : index
    %c0_20 = arith.constant 0 : index
    %44 = vector.load %arg2[%c0_19, %c0_20] : memref<9x256xf32, #tpu.memory_space<vmem>>, vector<1x256xf32>
    %45 = vector.broadcast %44 : vector<1x256xf32> to vector<8x256xf32>
    %46 = arith.mulf %43, %45 : vector<8x256xf32>
    %c16_i32_21 = arith.constant 16 : i32
    %47 = tpu.dynamic_rotate %41 by %c16_i32_21 dim 1 : vector<8x256xf32>, i32 -> vector<8x256xf32>
    %c1_22 = arith.constant 1 : index
    %c0_23 = arith.constant 0 : index
    %48 = vector.load %arg2[%c1_22, %c0_23] : memref<9x256xf32, #tpu.memory_space<vmem>>, vector<1x256xf32>
    %49 = vector.broadcast %48 : vector<1x256xf32> to vector<8x256xf32>
    %50 = arith.mulf %47, %49 : vector<8x256xf32>
    %c15_i32_24 = arith.constant 15 : i32
    %51 = tpu.dynamic_rotate %41 by %c15_i32_24 dim 1 : vector<8x256xf32>, i32 -> vector<8x256xf32>
    %c2_25 = arith.constant 2 : index
    %c0_26 = arith.constant 0 : index
    %52 = vector.load %arg2[%c2_25, %c0_26] : memref<9x256xf32, #tpu.memory_space<vmem>>, vector<1x256xf32>
    %53 = vector.broadcast %52 : vector<1x256xf32> to vector<8x256xf32>
    %54 = arith.mulf %51, %53 : vector<8x256xf32>
    %c1_i32_27 = arith.constant 1 : i32
    %55 = tpu.dynamic_rotate %41 by %c1_i32_27 dim 1 : vector<8x256xf32>, i32 -> vector<8x256xf32>
    %c3_28 = arith.constant 3 : index
    %c0_29 = arith.constant 0 : index
    %56 = vector.load %arg2[%c3_28, %c0_29] : memref<9x256xf32, #tpu.memory_space<vmem>>, vector<1x256xf32>
    %57 = vector.broadcast %56 : vector<1x256xf32> to vector<8x256xf32>
    %58 = arith.mulf %55, %57 : vector<8x256xf32>
    %c255_i32_30 = arith.constant 255 : i32
    %59 = tpu.dynamic_rotate %41 by %c255_i32_30 dim 1 : vector<8x256xf32>, i32 -> vector<8x256xf32>
    %c5_31 = arith.constant 5 : index
    %c0_32 = arith.constant 0 : index
    %60 = vector.load %arg2[%c5_31, %c0_32] : memref<9x256xf32, #tpu.memory_space<vmem>>, vector<1x256xf32>
    %61 = vector.broadcast %60 : vector<1x256xf32> to vector<8x256xf32>
    %62 = arith.mulf %59, %61 : vector<8x256xf32>
    %c241_i32_33 = arith.constant 241 : i32
    %63 = tpu.dynamic_rotate %41 by %c241_i32_33 dim 1 : vector<8x256xf32>, i32 -> vector<8x256xf32>
    %c6_34 = arith.constant 6 : index
    %c0_35 = arith.constant 0 : index
    %64 = vector.load %arg2[%c6_34, %c0_35] : memref<9x256xf32, #tpu.memory_space<vmem>>, vector<1x256xf32>
    %65 = vector.broadcast %64 : vector<1x256xf32> to vector<8x256xf32>
    %66 = arith.mulf %63, %65 : vector<8x256xf32>
    %c240_i32_36 = arith.constant 240 : i32
    %67 = tpu.dynamic_rotate %41 by %c240_i32_36 dim 1 : vector<8x256xf32>, i32 -> vector<8x256xf32>
    %c7_37 = arith.constant 7 : index
    %c0_38 = arith.constant 0 : index
    %68 = vector.load %arg2[%c7_37, %c0_38] : memref<9x256xf32, #tpu.memory_space<vmem>>, vector<1x256xf32>
    %69 = vector.broadcast %68 : vector<1x256xf32> to vector<8x256xf32>
    %70 = arith.mulf %67, %69 : vector<8x256xf32>
    %c239_i32_39 = arith.constant 239 : i32
    %71 = tpu.dynamic_rotate %41 by %c239_i32_39 dim 1 : vector<8x256xf32>, i32 -> vector<8x256xf32>
    %c8_40 = arith.constant 8 : index
    %c0_41 = arith.constant 0 : index
    %72 = vector.load %arg2[%c8_40, %c0_41] : memref<9x256xf32, #tpu.memory_space<vmem>>, vector<1x256xf32>
    %73 = vector.broadcast %72 : vector<1x256xf32> to vector<8x256xf32>
    %74 = arith.mulf %71, %73 : vector<8x256xf32>
    %75 = tpu.concatenate %46, %50, %54, %58, %41, %62, %66, %70, %74 in 0 : vector<8x256xf32>, vector<8x256xf32>, vector<8x256xf32>, vector<8x256xf32>, vector<8x256xf32>, vector<8x256xf32>, vector<8x256xf32>, vector<8x256xf32>, vector<8x256xf32> -> vector<72x256xf32>
    %cst_42 = arith.constant dense<0.000000e+00> : vector<8x256xf32>
    %76 = tpu.matmul %42, %75, %cst_42 {dimension_numbers = #tpu.dot_dimension_numbers<[1], [0], [0], [1], [0, 0, 1, 1], [], []>} : vector<8x72xf32>, vector<72x256xf32>, vector<8x256xf32> -> vector<8x256xf32>
    %c0_43 = arith.constant 0 : index
    %c0_44 = arith.constant 0 : index
    %77 = vector.load %arg6[%c0_43, %c0_44] : memref<8x1xf32, #tpu.memory_space<vmem>>, vector<8x1xf32>
    %78 = vector.broadcast %77 : vector<8x1xf32> to vector<8x256xf32>
    %79 = arith.addf %76, %78 : vector<8x256xf32>
    %80 = math.absf %79 : vector<8x256xf32>
    %cst_45 = arith.constant dense<0.000000e+00> : vector<256xf32>
    %81 = vector.multi_reduction <add>, %80, %cst_45 [0] : vector<8x256xf32> to vector<256xf32>
    %82 = vector.shape_cast %81 : vector<256xf32> to vector<1x256xf32>
    %cst_46 = arith.constant 9.99999997E-7 : f32
    %83 = vector.broadcast %cst_46 : f32 to vector<1x256xf32>
    %84 = arith.addf %82, %83 : vector<1x256xf32>
    %cst_47 = arith.constant dense<0.000000e+00> : vector<256xf32>
    %85 = vector.multi_reduction <add>, %79, %cst_47 [0] : vector<8x256xf32> to vector<256xf32>
    %86 = vector.shape_cast %85 : vector<256xf32> to vector<1x256xf32>
    %87 = tpu.reciprocal %84 {approx = true} : vector<1x256xf32> -> vector<1x256xf32>
    %88 = arith.mulf %84, %87 : vector<1x256xf32>
    %cst_48 = arith.constant 2.000000e+00 : f32
    %89 = vector.broadcast %cst_48 : f32 to vector<1x256xf32>
    %90 = arith.subf %89, %88 : vector<1x256xf32>
    %91 = arith.mulf %87, %90 : vector<1x256xf32>
    %92 = vector.broadcast %91 : vector<1x256xf32> to vector<8x256xf32>
    %93 = arith.mulf %79, %92 : vector<8x256xf32>
    %94 = arith.mulf %86, %91 : vector<1x256xf32>
    %cst_49 = arith.constant 1.000000e+00 : f32
    %95 = vector.broadcast %cst_49 : f32 to vector<1x256xf32>
    %96 = arith.subf %95, %94 : vector<1x256xf32>
    %97 = vector.extract_strided_slice %93 {offsets = [0, 0], sizes = [4, 256], strides = [1, 1]} : vector<8x256xf32> to vector<4x256xf32>
    %c0_50 = arith.constant 0 : index
    %c0_51 = arith.constant 0 : index
    %c0_52 = arith.constant 0 : index
    %98 = vector.load %arg7[%c0_50, %c0_51, %c0_52] : memref<1x9x256xf32, #tpu.memory_space<vmem>>, vector<1x4x256xf32>
    %99 = vector.shape_cast %98 : vector<1x4x256xf32> to vector<4x256xf32>
    %100 = vector.shape_cast %97 : vector<4x256xf32> to vector<1x4x256xf32>
    tpu.vector_store %arg7[%c0_50, %c0_51, %c0_52], %100 {strides = array<i32>} : memref<1x9x256xf32, #tpu.memory_space<vmem>>, vector<1x4x256xf32>,
    %c0_53 = arith.constant 0 : index
    %c4 = arith.constant 4 : index
    %c0_54 = arith.constant 0 : index
    %101 = vector.load %arg7[%c0_53, %c4, %c0_54] : memref<1x9x256xf32, #tpu.memory_space<vmem>>, vector<1x1x256xf32>
    %102 = vector.shape_cast %101 : vector<1x1x256xf32> to vector<1x256xf32>
    %103 = vector.shape_cast %96 : vector<1x256xf32> to vector<1x1x256xf32>
    tpu.vector_store %arg7[%c0_53, %c4, %c0_54], %103 {strides = array<i32>} : memref<1x9x256xf32, #tpu.memory_space<vmem>>, vector<1x1x256xf32>,
    %104 = vector.extract_strided_slice %93 {offsets = [4, 0], sizes = [4, 256], strides = [1, 1]} : vector<8x256xf32> to vector<4x256xf32>
    %c0_55 = arith.constant 0 : index
    %c5_56 = arith.constant 5 : index
    %c0_57 = arith.constant 0 : index
    %105 = vector.load %arg7[%c0_55, %c5_56, %c0_57] : memref<1x9x256xf32, #tpu.memory_space<vmem>>, vector<1x4x256xf32>
    %106 = vector.shape_cast %105 : vector<1x4x256xf32> to vector<4x256xf32>
    %107 = vector.shape_cast %104 : vector<4x256xf32> to vector<1x4x256xf32>
    tpu.vector_store %arg7[%c0_55, %c5_56, %c0_57], %107 {strides = array<i32>} : memref<1x9x256xf32, #tpu.memory_space<vmem>>, vector<1x4x256xf32>,
    return
  }
  func.func @transform_0(%arg0: i32) -> (i32, i32, i32) {
    %c0_i32 = arith.constant 0 : i32
    %c0_i32_0 = arith.constant 0 : i32
    %c0_i32_1 = arith.constant 0 : i32
    return %arg0, %c0_i32, %c0_i32_0 : i32, i32, i32
  }
  func.func @transform_1(%arg0: i32) -> (i32, i32) {
    %c0_i32 = arith.constant 0 : i32
    %c0_i32_0 = arith.constant 0 : i32
    %c0_i32_1 = arith.constant 0 : i32
    return %c0_i32, %c0_i32_0 : i32, i32
  }
  func.func @transform_2(%arg0: i32) -> (i32, i32) {
    %c0_i32 = arith.constant 0 : i32
    %c0_i32_0 = arith.constant 0 : i32
    %c0_i32_1 = arith.constant 0 : i32
    return %c0_i32, %c0_i32_0 : i32, i32
  }
  func.func @transform_3(%arg0: i32) -> (i32, i32) {
    %c0_i32 = arith.constant 0 : i32
    %c0_i32_0 = arith.constant 0 : i32
    %c0_i32_1 = arith.constant 0 : i32
    return %c0_i32, %c0_i32_0 : i32, i32
  }
  func.func @transform_4(%arg0: i32) -> (i32, i32) {
    %c0_i32 = arith.constant 0 : i32
    %c0_i32_0 = arith.constant 0 : i32
    %c0_i32_1 = arith.constant 0 : i32
    return %c0_i32, %c0_i32_0 : i32, i32
  }
  func.func @transform_5(%arg0: i32) -> (i32, i32) {
    %c0_i32 = arith.constant 0 : i32
    %c0_i32_0 = arith.constant 0 : i32
    %c0_i32_1 = arith.constant 0 : i32
    return %c0_i32, %c0_i32_0 : i32, i32
  }
  func.func @transform_6(%arg0: i32) -> (i32, i32, i32) {
    %c0_i32 = arith.constant 0 : i32
    %c0_i32_0 = arith.constant 0 : i32
    %c0_i32_1 = arith.constant 0 : i32
    return %arg0, %c0_i32, %c0_i32_0 : i32, i32, i32
  }
}

</mosaic_0001>

<llo_original>
// kernel: gen_kernel_forward.1
$region0: #{gen_kernel_forward.1}
  #allocation0 [shape = 'u32[]', space=smem, size = 0x4, offset = 0x4, fixed_abs, tag = 'smem constant byte address 0x4 - core index']
  #allocation1 [shape = 'u32[144,128]{1,0:T(1,128)}', space=vmem, size = 0x12000, scoped, tag = 'internal scratch']
  %s0 = inlined_call_operand.vmem [shape: f32[2,8,256], index: 0, kind: input, shape index: {}]
  %s1 = inlined_call_operand.vmem [shape: f32[9,256], index: 1, kind: input, shape index: {}]
  %s2 = inlined_call_operand.vmem [shape: f32[8,72], index: 2, kind: input, shape index: {}]
  %s3 = inlined_call_operand.vmem [shape: f32[8,1], index: 3, kind: input, shape index: {}]
  %s4 = inlined_call_operand.vmem [shape: f32[8,72], index: 4, kind: input, shape index: {}]
  %s5 = inlined_call_operand.vmem [shape: f32[8,1], index: 5, kind: input, shape index: {}]
  %s6 = inlined_call_operand.vmem [shape: f32[2,9,256], index: 6, kind: output, shape index: {}]
  %s7 = sld [smem:[#allocation0]]
  $region57: #{gen_kernel_forward.1} parent=0
    _
  %s9 = ssub.s32 1, %s7
  %s10 = scalar_select 0, %s9, %s7
  loop: start=0, step=1, limit=4
  $region2: #{gen_kernel_forward.1} parent=0 // loop_pre_header
    _
  $region3: #{gen_kernel_forward.1} parent=0 // loop_header
    %s12 = sphi 0, %s16
    %p13 = scmp.ge.s32.totalorder %s12, 4
    %s22 = sphi 0, %s24
    %s25 = sphi 0, %s22
    %s26 = sphi 0, %s25
    %s42 = sphi 0, %s26
    %s46 = sphi 0, %s46
    %s48 = sphi 0, %s46
    %s49 = sphi 0, %s48
    %s63 = sphi 0, %s49
    %s67 = sphi 0, %s67
    %s69 = sphi 0, %s67
    %s70 = sphi 0, %s69
    %s84 = sphi 0, %s70
    %s88 = sphi 0, %s88
    %s90 = sphi 0, %s88
    %s91 = sphi 0, %s90
    %s105 = sphi 0, %s91
    %s109 = sphi 0, %s109
    %s111 = sphi 0, %s109
    %s112 = sphi 0, %s111
    %s126 = sphi 0, %s112
    %s130 = sphi 0, %s130
    %s132 = sphi 0, %s130
    %s133 = sphi 0, %s132
    %s147 = sphi 0, %s133
    %s153 = sphi 0, %s155
    %s156 = sphi 0, %s153
    %s157 = sphi 0, %s156
    %s173 = sphi 0, %s157
  $region4: #{gen_kernel_forward.1} parent=0 // loop_header_branch
    %15 = sbr.rel (%p13) target = $region8
  $region5: #{gen_kernel_forward.1} parent=0 // loop_body
    %s17 = ssub.s32 %s12, 1
    %s18 = ssub.s32 %s12, 2
    %s19 = sadd.s32 %s12, 1
    %s20 = ssub.s32 %s12, %s19
    %p21 = scmp.eq.s32.totalorder %s20, 0
    %s23 = sadd.s32 %s22, 1
    %s24 = scalar_select %p21, %s22, %s23
    %p27 = pneg %p21
    %p28 = scmp.eq.s32.totalorder %s12, 1
    %p29 = por %p27, %p28
    %p30 = scmp.ne.s32.totalorder %s22, %s25
    %p31 = scmp.eq.s32.totalorder %s12, 0
    %p32 = por %p30, %p31
    %p33 = scmp.ne.s32.totalorder %s22, %s25
    %p34 = scmp.eq.s32.totalorder %s17, 1
    %p35 = por %p33, %p34
    %p36 = scmp.ne.s32.totalorder %s25, %s26
    %p37 = scmp.eq.s32.totalorder %s17, 0
    %p38 = por %p36, %p37
    %p39 = scmp.ne.s32.totalorder %s25, %s26
    %p40 = scmp.eq.s32.totalorder %s18, 1
    %p41 = por %p39, %p40
    %p43 = scmp.ne.s32.totalorder %s26, %s42
    %p44 = scmp.eq.s32.totalorder %s18, 0
    %p45 = por %p43, %p44
    %s47 = sadd.s32 %s46, 1
    %p50 = scmp.eq.s32.totalorder %s12, 1
    %p51 = scmp.ne.s32.totalorder %s46, %s48
    %p52 = scmp.eq.s32.totalorder %s12, 0
    %p53 = por %p51, %p52
    %p54 = scmp.ne.s32.totalorder %s46, %s48
    %p55 = scmp.eq.s32.totalorder %s17, 1
    %p56 = por %p54, %p55
    %p57 = scmp.ne.s32.totalorder %s48, %s49
    %p58 = scmp.eq.s32.totalorder %s17, 0
    %p59 = por %p57, %p58
    %p60 = scmp.ne.s32.totalorder %s48, %s49
    %p61 = scmp.eq.s32.totalorder %s18, 1
    %p62 = por %p60, %p61
    %p64 = scmp.ne.s32.totalorder %s49, %s63
    %p65 = scmp.eq.s32.totalorder %s18, 0
    %p66 = por %p64, %p65
    %s68 = sadd.s32 %s67, 1
    %p71 = scmp.eq.s32.totalorder %s12, 1
    %p72 = scmp.ne.s32.totalorder %s67, %s69
    %p73 = scmp.eq.s32.totalorder %s12, 0
    %p74 = por %p72, %p73
    %p75 = scmp.ne.s32.totalorder %s67, %s69
    %p76 = scmp.eq.s32.totalorder %s17, 1
    %p77 = por %p75, %p76
    %p78 = scmp.ne.s32.totalorder %s69, %s70
    %p79 = scmp.eq.s32.totalorder %s17, 0
    %p80 = por %p78, %p79
    %p81 = scmp.ne.s32.totalorder %s69, %s70
    %p82 = scmp.eq.s32.totalorder %s18, 1
    %p83 = por %p81, %p82
    %p85 = scmp.ne.s32.totalorder %s70, %s84
    %p86 = scmp.eq.s32.totalorder %s18, 0
    %p87 = por %p85, %p86
    %s89 = sadd.s32 %s88, 1
    %p92 = scmp.eq.s32.totalorder %s12, 1
    %p93 = scmp.ne.s32.totalorder %s88, %s90
    %p94 = scmp.eq.s32.totalorder %s12, 0
    %p95 = por %p93, %p94
    %p96 = scmp.ne.s32.totalorder %s88, %s90
    %p97 = scmp.eq.s32.totalorder %s17, 1
    %p98 = por %p96, %p97
    %p99 = scmp.ne.s32.totalorder %s90, %s91
    %p100 = scmp.eq.s32.totalorder %s17, 0
    %p101 = por %p99, %p100
    %p102 = scmp.ne.s32.totalorder %s90, %s91
    %p103 = scmp.eq.s32.totalorder %s18, 1
    %p104 = por %p102, %p103
    %p106 = scmp.ne.s32.totalorder %s91, %s105
    %p107 = scmp.eq.s32.totalorder %s18, 0
    %p108 = por %p106, %p107
    %s110 = sadd.s32 %s109, 1
    %p113 = scmp.eq.s32.totalorder %s12, 1
    %p114 = scmp.ne.s32.totalorder %s109, %s111
    %p115 = scmp.eq.s32.totalorder %s12, 0
    %p116 = por %p114, %p115
    %p117 = scmp.ne.s32.totalorder %s109, %s111
    %p118 = scmp.eq.s32.totalorder %s17, 1
    %p119 = por %p117, %p118
    %p120 = scmp.ne.s32.totalorder %s111, %s112
    %p121 = scmp.eq.s32.totalorder %s17, 0
    %p122 = por %p120, %p121
    %p123 = scmp.ne.s32.totalorder %s111, %s112
    %p124 = scmp.eq.s32.totalorder %s18, 1
    %p125 = por %p123, %p124
    %p127 = scmp.ne.s32.totalorder %s112, %s126
    %p128 = scmp.eq.s32.totalorder %s18, 0
    %p129 = por %p127, %p128
    %s131 = sadd.s32 %s130, 1
    %p134 = scmp.eq.s32.totalorder %s12, 1
    %p135 = scmp.ne.s32.totalorder %s130, %s132
    %p136 = scmp.eq.s32.totalorder %s12, 0
    %p137 = por %p135, %p136
    %p138 = scmp.ne.s32.totalorder %s130, %s132
    %p139 = scmp.eq.s32.totalorder %s17, 1
    %p140 = por %p138, %p139
    %p141 = scmp.ne.s32.totalorder %s132, %s133
    %p142 = scmp.eq.s32.totalorder %s17, 0
    %p143 = por %p141, %p142
    %p144 = scmp.ne.s32.totalorder %s132, %s133
    %p145 = scmp.eq.s32.totalorder %s18, 1
    %p146 = por %p144, %p145
    %p148 = scmp.ne.s32.totalorder %s133, %s147
    %p149 = scmp.eq.s32.totalorder %s18, 0
    %p150 = por %p148, %p149
    %s151 = ssub.s32 %s12, %s19
    %p152 = scmp.eq.s32.totalorder %s151, 0
    %s154 = sadd.s32 %s153, 1
    %s155 = scalar_select %p152, %s153, %s154
    %p158 = pneg %p152
    %p159 = scmp.eq.s32.totalorder %s12, 1
    %p160 = por %p158, %p159
    %p161 = scmp.ne.s32.totalorder %s153, %s156
    %p162 = scmp.eq.s32.totalorder %s12, 0
    %p163 = por %p161, %p162
    %p164 = scmp.ne.s32.totalorder %s153, %s156
    %p165 = scmp.eq.s32.totalorder %s17, 1
    %p166 = por %p164, %p165
    %p167 = scmp.ne.s32.totalorder %s156, %s157
    %p168 = scmp.eq.s32.totalorder %s17, 0
    %p169 = por %p167, %p168
    %p170 = scmp.ne.s32.totalorder %s156, %s157
    %p171 = scmp.eq.s32.totalorder %s18, 1
    %p172 = por %p170, %p171
    %p174 = scmp.ne.s32.totalorder %s157, %s173
    %p175 = scmp.eq.s32.totalorder %s18, 0
    %p176 = por %p174, %p175
    %p177 = scmp.le.s32.totalorder 1, %s12
    %p178 = scmp.lt.s32.totalorder %s12, 3
    %p179 = pnand %p177, %p178
    %p180 = pneg %p179
    // Predicated region
    $region9: #{gen_kernel_forward.1} parent=5 // pred_check
      _
    $region10: #{gen_kernel_forward.1} parent=5 // pred_check_branch
      %182 = sbr.rel (%p179) target = $region12
    $region11: #{gen_kernel_forward.1} parent=5 // pred_region
      %s183 = ssub.s32 %s12, 1
      // Predicated region
      $region13: #{gen_kernel_forward.1} parent=11 // pred_check
        %p184 = pneg %p59
      $region14: #{gen_kernel_forward.1} parent=11 // pred_check_branch
        %186 = sbr.rel (%p184) target = $region16
      $region15: #{gen_kernel_forward.1} parent=11 // pred_region
        _
      $region16: #{gen_kernel_forward.1} parent=11 // pred_fallthru
        _
      // Predicated region
      $region17: #{gen_kernel_forward.1} parent=11 // pred_check
        %p187 = pneg %p80
      $region18: #{gen_kernel_forward.1} parent=11 // pred_check_branch
        %189 = sbr.rel (%p187) target = $region20
      $region19: #{gen_kernel_forward.1} parent=11 // pred_region
        _
      $region20: #{gen_kernel_forward.1} parent=11 // pred_fallthru
        _
      // Predicated region
      $region21: #{gen_kernel_forward.1} parent=11 // pred_check
        %p190 = pneg %p101
      $region22: #{gen_kernel_forward.1} parent=11 // pred_check_branch
        %192 = sbr.rel (%p190) target = $region24
      $region23: #{gen_kernel_forward.1} parent=11 // pred_region
        _
      $region24: #{gen_kernel_forward.1} parent=11 // pred_fallthru
        _
      // Predicated region
      $region25: #{gen_kernel_forward.1} parent=11 // pred_check
        %p193 = pneg %p122
      $region26: #{gen_kernel_forward.1} parent=11 // pred_check_branch
        %195 = sbr.rel (%p193) target = $region28
      $region27: #{gen_kernel_forward.1} parent=11 // pred_region
        _
      $region28: #{gen_kernel_forward.1} parent=11 // pred_fallthru
        _
      // Predicated region
      $region29: #{gen_kernel_forward.1} parent=11 // pred_check
        %p196 = pneg %p143
      $region30: #{gen_kernel_forward.1} parent=11 // pred_check_branch
        %198 = sbr.rel (%p196) target = $region32
      $region31: #{gen_kernel_forward.1} parent=11 // pred_region
        _
      $region32: #{gen_kernel_forward.1} parent=11 // pred_fallthru
        _
    $region12: #{gen_kernel_forward.1} parent=5 // pred_fallthru
      _
    %p199 = scmp.lt.s32.totalorder %s12, 2
    // Predicated region
    $region33: #{gen_kernel_forward.1} parent=5 // pred_check
      %p200 = pneg %p199
    $region34: #{gen_kernel_forward.1} parent=5 // pred_check_branch
      %202 = sbr.rel (%p200) target = $region36
    $region35: #{gen_kernel_forward.1} parent=5 // pred_region
      // Predicated region
      $region37: #{gen_kernel_forward.1} parent=35 // pred_check
        %p203 = pneg %p32
      $region38: #{gen_kernel_forward.1} parent=35 // pred_check_branch
        %205 = sbr.rel (%p203) target = $region40
      $region39: #{gen_kernel_forward.1} parent=35 // pred_region
        %p206 = scmp.lt.s32.totalorder %s12, 1
        %s207 = scalar_select %p206, %s12, 1
        %s208 = smul.addr %s207, 2
        %s209 = smul.addr %s208, 8
        %s210 = scalar_lea.vmem %s0, %s209
      $region40: #{gen_kernel_forward.1} parent=35 // pred_fallthru
        _
    $region36: #{gen_kernel_forward.1} parent=5 // pred_fallthru
      _
    %p211 = scmp.le.s32.totalorder 1, %s12
    %p212 = scmp.lt.s32.totalorder %s12, 3
    %p213 = pnand %p211, %p212
    %p214 = pneg %p213
    // Predicated region
    $region41: #{gen_kernel_forward.1} parent=5 // pred_check
      _
    $region42: #{gen_kernel_forward.1} parent=5 // pred_check_branch
      %216 = sbr.rel (%p213) target = $region44
    $region43: #{gen_kernel_forward.1} parent=5 // pred_region
      %s217 = ssub.s32 %s12, 1
      %p218 = scmp.lt.s32.totalorder %s17, 1
      %s219 = scalar_select %p218, %s17, 1
      %s220 = smul.addr %s219, 2
      %s221 = smul.addr %s220, 8
      %s222 = scalar_lea.vmem %s0, %s221
      %p223 = pneg %p38
      %p224 = pneg %p35
      %p225 = pneg %p59
      %p226 = pneg %p56
      %p227 = pneg %p80
      %p228 = pneg %p77
      %p229 = pneg %p101
      %p230 = pneg %p98
      %p231 = pneg %p122
      %p232 = pneg %p119
      %p233 = pneg %p143
      %p234 = pneg %p140
      %p235 = pneg %p169
      %p236 = pneg %p166
      %p237 = scmp.lt.s32.totalorder %s17, 1
      %s238 = scalar_select %p237, %s17, 1
      %s239 = smul.addr %s238, 4
      %s240 = smul.addr %s239, 8
      %s241 = scalar_lea.vmem %s6, %s240
      %p242 = scmp.lt.s32.totalorder %s17, 1
      %s243 = scalar_select %p242, %s17, 1
      %s244 = smul.addr %s243, 2
      %s245 = smul.addr %s244, 8
      %s246 = scalar_lea.vmem %s0, %s245
      %p247 = scmp.lt.s32.totalorder %s17, 1
      %s248 = scalar_select %p247, %s17, 1
      %s249 = smul.addr %s248, 4
      %s250 = smul.addr %s249, 8
      %s251 = scalar_lea.vmem %s6, %s250
      %v252 = vld [vmem:[%s246] sm:$0xff]
      %v253 = vld [vmem:[%s246 + $0x8] sm:$0xff]
      %v254 = vld [vmem:[%s2] sm:$0xff]
      %255 = vrot.lane.b32.xlu0 %v252, 17
      %v256 = vpop.permute.xlu0 %255
      %257 = vrot.lane.b32.xlu0 %v253, 17
      %v258 = vpop.permute.xlu0 %257
      %v259 = vlaneseq
      %v260 = vand.u32 %v259, 127
      %vm261 = vcmp.lt.s32.totalorder %v260, 17
      %v262 = vsel %vm261, %v256, %v258
      %v263 = vsel %vm261, %v258, %v256
      %v264 = vld [vmem:[%s1] ss:$8 sm:$0x3]
      %v266 = vlaneseq
      %v267 = vshrl.u32 %v266, 7
      %v268 = vsub.s32 0, %v267
      %v269 = vrot.slane %v264, %v268
      %v270 = vlaneseq
      %v271 = vshrl.u32 %v270, 7
      %v272 = vsub.s32 1, %v271
      %v273 = vrot.slane %v264, %v272
      %v276 = vmul.f32 %v263, %v269
      %v277 = vmul.f32 %v262, %v273
      %278 = vrot.lane.b32.xlu0 %v252, 16
      %v279 = vpop.permute.xlu0 %278
      %280 = vrot.lane.b32.xlu0 %v253, 16
      %v281 = vpop.permute.xlu0 %280
      %vm282 = vcmp.lt.s32.totalorder %v260, 16
      %v283 = vsel %vm282, %v279, %v281
      %v284 = vsel %vm282, %v281, %v279
      %s285 = scalar_lea.vmem %s1, 1
      %v286 = vld [vmem:[%s285] ss:$8 sm:$0x3]
      %v288 = vlaneseq
      %v289 = vshrl.u32 %v288, 7
      %v290 = vsub.s32 0, %v289
      %v291 = vrot.slane %v286, %v290
      %v292 = vlaneseq
      %v293 = vshrl.u32 %v292, 7
      %v294 = vsub.s32 1, %v293
      %v295 = vrot.slane %v286, %v294
      %v298 = vmul.f32 %v284, %v291
      %v299 = vmul.f32 %v283, %v295
      %300 = vrot.lane.b32.xlu0 %v252, 15
      %v301 = vpop.permute.xlu0 %300
      %302 = vrot.lane.b32.xlu0 %v253, 15
      %v303 = vpop.permute.xlu0 %302
      %vm304 = vcmp.lt.s32.totalorder %v260, 15
      %v305 = vsel %vm304, %v301, %v303
      %v306 = vsel %vm304, %v303, %v301
      %s307 = scalar_lea.vmem %s1, 2
      %v308 = vld [vmem:[%s307] ss:$8 sm:$0x3]
      %v310 = vlaneseq
      %v311 = vshrl.u32 %v310, 7
      %v312 = vsub.s32 0, %v311
      %v313 = vrot.slane %v308, %v312
      %v314 = vlaneseq
      %v315 = vshrl.u32 %v314, 7
      %v316 = vsub.s32 1, %v315
      %v317 = vrot.slane %v308, %v316
      %v320 = vmul.f32 %v306, %v313
      %v321 = vmul.f32 %v305, %v317
      %322 = vrot.lane.b32.xlu0 %v252, 1
      %v323 = vpop.permute.xlu0 %322
      %324 = vrot.lane.b32.xlu0 %v253, 1
      %v325 = vpop.permute.xlu0 %324
      %vm326 = vcmp.lt.s32.totalorder %v260, 1
      %v327 = vsel %vm326, %v323, %v325
      %v328 = vsel %vm326, %v325, %v323
      %s329 = scalar_lea.vmem %s1, 3
      %v330 = vld [vmem:[%s329] ss:$8 sm:$0x3]
      %v332 = vlaneseq
      %v333 = vshrl.u32 %v332, 7
      %v334 = vsub.s32 0, %v333
      %v335 = vrot.slane %v330, %v334
      %v336 = vlaneseq
      %v337 = vshrl.u32 %v336, 7
      %v338 = vsub.s32 1, %v337
      %v339 = vrot.slane %v330, %v338
      %v342 = vmul.f32 %v328, %v335
      %v343 = vmul.f32 %v327, %v339
      %344 = vrot.lane.b32.xlu0 %v252, 127
      %v345 = vpop.permute.xlu0 %344
      %346 = vrot.lane.b32.xlu0 %v253, 127
      %v347 = vpop.permute.xlu0 %346
      %vm348 = vcmp.lt.s32.totalorder %v260, 127
      %v349 = vsel %vm348, %v345, %v347
      %v350 = vsel %vm348, %v347, %v345
      %s351 = scalar_lea.vmem %s1, 5
      %v352 = vld [vmem:[%s351] ss:$8 sm:$0x3]
      %v354 = vlaneseq
      %v355 = vshrl.u32 %v354, 7
      %v356 = vsub.s32 0, %v355
      %v357 = vrot.slane %v352, %v356
      %v358 = vlaneseq
      %v359 = vshrl.u32 %v358, 7
      %v360 = vsub.s32 1, %v359
      %v361 = vrot.slane %v352, %v360
      %v364 = vmul.f32 %v349, %v357
      %v365 = vmul.f32 %v350, %v361
      %366 = vrot.lane.b32.xlu0 %v252, 113
      %v367 = vpop.permute.xlu0 %366
      %368 = vrot.lane.b32.xlu0 %v253, 113
      %v369 = vpop.permute.xlu0 %368
      %vm370 = vcmp.lt.s32.totalorder %v260, 113
      %v371 = vsel %vm370, %v367, %v369
      %v372 = vsel %vm370, %v369, %v367
      %s373 = scalar_lea.vmem %s1, 6
      %v374 = vld [vmem:[%s373] ss:$8 sm:$0x3]
      %v376 = vlaneseq
      %v377 = vshrl.u32 %v376, 7
      %v378 = vsub.s32 0, %v377
      %v379 = vrot.slane %v374, %v378
      %v380 = vlaneseq
      %v381 = vshrl.u32 %v380, 7
      %v382 = vsub.s32 1, %v381
      %v383 = vrot.slane %v374, %v382
      %v386 = vmul.f32 %v371, %v379
      %v387 = vmul.f32 %v372, %v383
      %388 = vrot.lane.b32.xlu0 %v252, 112
      %v389 = vpop.permute.xlu0 %388
      %390 = vrot.lane.b32.xlu0 %v253, 112
      %v391 = vpop.permute.xlu0 %390
      %vm392 = vcmp.lt.s32.totalorder %v260, 112
      %v393 = vsel %vm392, %v389, %v391
      %v394 = vsel %vm392, %v391, %v389
      %s395 = scalar_lea.vmem %s1, 7
      %v396 = vld [vmem:[%s395] ss:$8 sm:$0x3]
      %v398 = vlaneseq
      %v399 = vshrl.u32 %v398, 7
      %v400 = vsub.s32 0, %v399
      %v401 = vrot.slane %v396, %v400
      %v402 = vlaneseq
      %v403 = vshrl.u32 %v402, 7
      %v404 = vsub.s32 1, %v403
      %v405 = vrot.slane %v396, %v404
      %v408 = vmul.f32 %v393, %v401
      %v409 = vmul.f32 %v394, %v405
      %410 = vrot.lane.b32.xlu0 %v252, 111
      %v411 = vpop.permute.xlu0 %410
      %412 = vrot.lane.b32.xlu0 %v253, 111
      %v413 = vpop.permute.xlu0 %412
      %vm414 = vcmp.lt.s32.totalorder %v260, 111
      %v415 = vsel %vm414, %v411, %v413
      %v416 = vsel %vm414, %v413, %v411
      %s417 = scalar_lea.vmem %s1, 16
      %v418 = vld [vmem:[%s417] ss:$8 sm:$0x3]
      %v420 = vlaneseq
      %v421 = vshrl.u32 %v420, 7
      %v422 = vsub.s32 0, %v421
      %v423 = vrot.slane %v418, %v422
      %v424 = vlaneseq
      %v425 = vshrl.u32 %v424, 7
      %v426 = vsub.s32 1, %v425
      %v427 = vrot.slane %v418, %v426
      %v430 = vmul.f32 %v415, %v423
      %v431 = vmul.f32 %v416, %v427
      %v432 = vld [vmem:[%s3] sm:$0xff]
      %434 = vset.pattern.permute.xlu0 0
      %435 = vperm.xlu0 %434, %v432
      %v436 = vpop.permute.xlu0 %435
      %vm438 = vcmask 588800
      %v440 = vsel %vm438, %v254, 0
      %442 = vmatprep.subr.mxu0 %v277
      %443 = vmatpush1.msra.mxu0 %v276
      %444 = vmatprep.subr.mxu0 %v299
      %445 = vmatpush1.msra.mxu0 %v298
      %446 = vmatprep.subr.mxu0 %v321
      %447 = vmatpush1.msra.mxu0 %v320
      %448 = vmatprep.subr.mxu0 %v343
      %449 = vmatpush1.msra.mxu0 %v342
      %450 = vmatprep.subr.mxu0 %v253
      %451 = vmatpush1.msra.mxu0 %v252
      %452 = vmatprep.subr.mxu0 %v365
      %453 = vmatpush1.msra.mxu0 %v364
      %454 = vmatprep.subr.mxu0 %v387
      %455 = vmatpush1.msra.mxu0 %v386
      %456 = vmatprep.subr.mxu0 %v409
      %457 = vmatpush1.msra.mxu0 %v408
      %458 = vmatprep.subr.mxu0 %v431
      %459 = vmatpush1.msra.mxu0 %v430
      %460 = vmatprep.subr.mxu0 0.0
      %461 = vmatpush1.msra.mxu0 0.0
      %462 = vmatprep.subr.mxu0 0.0
      %463 = vmatpush1.msra.mxu0 0.0
      %464 = vmatprep.subr.mxu0 0.0
      %465 = vmatpush1.msra.mxu0 0.0
      %466 = vmatprep.subr.mxu0 0.0
      %467 = vmatpush1.msra.mxu0 0.0
      %468 = vmatprep.subr.mxu0 0.0
      %469 = vmatpush1.msra.mxu0 0.0
      %470 = vmatprep.subr.mxu0 0.0
      %471 = vmatpush1.msra.mxu0 0.0
      %472 = vmatprep.subr.mxu0 0.0
      %473 = vmatpush1.msra.mxu0 0.0
      %474 = vmatprep.subr.mxu0 0.0
      %475 = vmatpush1.msra.mxu0 0.0
      %476 = vmatprep.subr.mxu0 0.0
      %477 = vmatpush1.msra.mxu0 0.0
      %478 = vmatprep.subr.mxu0 0.0
      %479 = vmatpush1.msra.mxu0 0.0
      %480 = vmatprep.subr.mxu0 0.0
      %481 = vmatpush1.msra.mxu0 0.0
      %482 = vmatprep.subr.mxu0 0.0
      %483 = vmatpush1.msra.mxu0 0.0
      %484 = vmatprep.subr.mxu0 0.0
      %485 = vmatpush1.msra.mxu0 0.0
      %486 = vmatprep.subr.mxu0 0.0
      %487 = vmatpush1.msra.mxu0 0.0
      %488 = vmatprep.subr.mxu0 0.0
      %489 = vmatpush1.msra.mxu0 0.0
      %490 = vmatprep.subr.mxu0 0.0
      %491 = vmatpush1.msra.mxu0 0.0
      %492 = vmatprep.subr.mxu0 0.0
      %493 = vmatpush1.msra.mxu0 0.0
      %494 = vmatprep.subr.mxu0 0.0
      %495 = vmatpush1.msra.mxu0 0.0
      %496 = vmatprep.subr.mxu0 0.0
      %497 = vmatpush1.msra.mxu0 0.0
      %498 = vmatprep.subr.mxu0 0.0
      %499 = vmatpush1.msra.mxu0 0.0
      %500 = vmatprep.subr.mxu0 0.0
      %501 = vmatpush1.msra.mxu0 0.0
      %502 = vmatprep.subr.mxu0 0.0
      %503 = vmatpush1.msra.mxu0 0.0
      %504 = vmatprep.subr.mxu0 0.0
      %505 = vmatpush1.msra.mxu0 0.0
      %506 = vmatprep.mubr.f32.mxu0 0.0
      %507 = vmatmul.mubr.f32.gmra.mrb[0].mxu0 %v440
      %v508 = vpop.f32.mrb[0].mxu0
      %v509 = vadd.f32 %v436, %v508
      %v510 = vpop.f32.mrb[0].mxu0
      %v511 = vadd.f32 %v436, %v510
      %512 = vdwg.mxu0
      %v513 = vmax.f32 %v509, 0.0
      %v514 = vmax.f32 %v511, 0.0
      %v515 = vld [vmem:[%s4] sm:$0xff]
      %516 = vrot.lane.b32.xlu0 %v513, 17
      %v517 = vpop.permute.xlu0 %516
      %518 = vrot.lane.b32.xlu0 %v514, 17
      %v519 = vpop.permute.xlu0 %518
      %v520 = vsel %vm261, %v517, %v519
      %v521 = vsel %vm261, %v519, %v517
      %v522 = vmul.f32 %v521, %v269
      %v523 = vmul.f32 %v520, %v273
      %524 = vrot.lane.b32.xlu0 %v513, 16
      %v525 = vpop.permute.xlu0 %524
      %526 = vrot.lane.b32.xlu0 %v514, 16
      %v527 = vpop.permute.xlu0 %526
      %v528 = vsel %vm282, %v525, %v527
      %v529 = vsel %vm282, %v527, %v525
      %v530 = vmul.f32 %v529, %v291
      %v531 = vmul.f32 %v528, %v295
      %532 = vrot.lane.b32.xlu0 %v513, 15
      %v533 = vpop.permute.xlu0 %532
      %534 = vrot.lane.b32.xlu0 %v514, 15
      %v535 = vpop.permute.xlu0 %534
      %v536 = vsel %vm304, %v533, %v535
      %v537 = vsel %vm304, %v535, %v533
      %v538 = vmul.f32 %v537, %v313
      %v539 = vmul.f32 %v536, %v317
      %540 = vrot.lane.b32.xlu0 %v513, 1
      %v541 = vpop.permute.xlu0 %540
      %542 = vrot.lane.b32.xlu0 %v514, 1
      %v543 = vpop.permute.xlu0 %542
      %v544 = vsel %vm326, %v541, %v543
      %v545 = vsel %vm326, %v543, %v541
      %v546 = vmul.f32 %v545, %v335
      %v547 = vmul.f32 %v544, %v339
      %548 = vrot.lane.b32.xlu0 %v513, 127
      %v549 = vpop.permute.xlu0 %548
      %550 = vrot.lane.b32.xlu0 %v514, 127
      %v551 = vpop.permute.xlu0 %550
      %v552 = vsel %vm348, %v549, %v551
      %v553 = vsel %vm348, %v551, %v549
      %v554 = vmul.f32 %v552, %v357
      %v555 = vmul.f32 %v553, %v361
      %556 = vrot.lane.b32.xlu0 %v513, 113
      %v557 = vpop.permute.xlu0 %556
      %558 = vrot.lane.b32.xlu0 %v514, 113
      %v559 = vpop.permute.xlu0 %558
      %v560 = vsel %vm370, %v557, %v559
      %v561 = vsel %vm370, %v559, %v557
      %v562 = vmul.f32 %v560, %v379
      %v563 = vmul.f32 %v561, %v383
      %564 = vrot.lane.b32.xlu0 %v513, 112
      %v565 = vpop.permute.xlu0 %564
      %566 = vrot.lane.b32.xlu0 %v514, 112
      %v567 = vpop.permute.xlu0 %566
      %v568 = vsel %vm392, %v565, %v567
      %v569 = vsel %vm392, %v567, %v565
      %v570 = vmul.f32 %v568, %v401
      %v571 = vmul.f32 %v569, %v405
      %572 = vrot.lane.b32.xlu0 %v513, 111
      %v573 = vpop.permute.xlu0 %572
      %574 = vrot.lane.b32.xlu0 %v514, 111
      %v575 = vpop.permute.xlu0 %574
      %v576 = vsel %vm414, %v573, %v575
      %v577 = vsel %vm414, %v575, %v573
      %v578 = vmul.f32 %v576, %v423
      %v579 = vmul.f32 %v577, %v427
      %v580 = vld [vmem:[%s5] sm:$0xff]
      %582 = vset.pattern.permute.xlu0 0
      %583 = vperm.xlu0 %582, %v580
      %v584 = vpop.permute.xlu0 %583
      %v587 = vsel %vm438, %v515, 0
      %589 = vmatprep.subr.mxu0 %v523
      %590 = vmatpush1.msra.mxu0 %v522
      %591 = vmatprep.subr.mxu0 %v531
      %592 = vmatpush1.msra.mxu0 %v530
      %593 = vmatprep.subr.mxu0 %v539
      %594 = vmatpush1.msra.mxu0 %v538
      %595 = vmatprep.subr.mxu0 %v547
      %596 = vmatpush1.msra.mxu0 %v546
      %597 = vmatprep.subr.mxu0 %v514
      %598 = vmatpush1.msra.mxu0 %v513
      %599 = vmatprep.subr.mxu0 %v555
      %600 = vmatpush1.msra.mxu0 %v554
      %601 = vmatprep.subr.mxu0 %v563
      %602 = vmatpush1.msra.mxu0 %v562
      %603 = vmatprep.subr.mxu0 %v571
      %604 = vmatpush1.msra.mxu0 %v570
      %605 = vmatprep.subr.mxu0 %v579
      %606 = vmatpush1.msra.mxu0 %v578
      %607 = vmatprep.subr.mxu0 0.0
      %608 = vmatpush1.msra.mxu0 0.0
      %609 = vmatprep.subr.mxu0 0.0
      %610 = vmatpush1.msra.mxu0 0.0
      %611 = vmatprep.subr.mxu0 0.0
      %612 = vmatpush1.msra.mxu0 0.0
      %613 = vmatprep.subr.mxu0 0.0
      %614 = vmatpush1.msra.mxu0 0.0
      %615 = vmatprep.subr.mxu0 0.0
      %616 = vmatpush1.msra.mxu0 0.0
      %617 = vmatprep.subr.mxu0 0.0
      %618 = vmatpush1.msra.mxu0 0.0
      %619 = vmatprep.subr.mxu0 0.0
      %620 = vmatpush1.msra.mxu0 0.0
      %621 = vmatprep.subr.mxu0 0.0
      %622 = vmatpush1.msra.mxu0 0.0
      %623 = vmatprep.subr.mxu0 0.0
      %624 = vmatpush1.msra.mxu0 0.0
      %625 = vmatprep.subr.mxu0 0.0
      %626 = vmatpush1.msra.mxu0 0.0
      %627 = vmatprep.subr.mxu0 0.0
      %628 = vmatpush1.msra.mxu0 0.0
      %629 = vmatprep.subr.mxu0 0.0
      %630 = vmatpush1.msra.mxu0 0.0
      %631 = vmatprep.subr.mxu0 0.0
      %632 = vmatpush1.msra.mxu0 0.0
      %633 = vmatprep.subr.mxu0 0.0
      %634 = vmatpush1.msra.mxu0 0.0
      %635 = vmatprep.subr.mxu0 0.0
      %636 = vmatpush1.msra.mxu0 0.0
      %637 = vmatprep.subr.mxu0 0.0
      %638 = vmatpush1.msra.mxu0 0.0
      %639 = vmatprep.subr.mxu0 0.0
      %640 = vmatpush1.msra.mxu0 0.0
      %641 = vmatprep.subr.mxu0 0.0
      %642 = vmatpush1.msra.mxu0 0.0
      %643 = vmatprep.subr.mxu0 0.0
      %644 = vmatpush1.msra.mxu0 0.0
      %645 = vmatprep.subr.mxu0 0.0
      %646 = vmatpush1.msra.mxu0 0.0
      %647 = vmatprep.subr.mxu0 0.0
      %648 = vmatpush1.msra.mxu0 0.0
      %649 = vmatprep.subr.mxu0 0.0
      %650 = vmatpush1.msra.mxu0 0.0
      %651 = vmatprep.subr.mxu0 0.0
      %652 = vmatpush1.msra.mxu0 0.0
      %653 = vmatprep.mubr.f32.mxu0 0.0
      %654 = vmatmul.mubr.f32.gmra.mrb[0].mxu0 %v587
      %v655 = vpop.f32.mrb[0].mxu0
      %v656 = vadd.f32 %v584, %v655
      %v657 = vpop.f32.mrb[0].mxu0
      %v658 = vadd.f32 %v584, %v657
      %659 = vdwg.mxu0
      %v660 = vand.u32 2147483647, %v656
      %v661 = vand.u32 2147483647, %v658
      %v662 = vrot.slane %v660, 4
      %v663 = vadd.f32 %v660, %v662
      %v664 = vrot.slane %v663, 2
      %v665 = vadd.f32 %v663, %v664
      %v666 = vrot.slane %v665, 1
      %v667 = vadd.f32 %v665, %v666
      %v668 = vrot.slane %v661, 4
      %v669 = vadd.f32 %v661, %v668
      %v670 = vrot.slane %v669, 2
      %v671 = vadd.f32 %v669, %v670
      %v672 = vrot.slane %v671, 1
      %v673 = vadd.f32 %v671, %v672
      %v674 = vadd.f32 %v667, 1e-06
      %v675 = vadd.f32 %v673, 1e-06
      %v676 = vrot.slane %v656, 4
      %v677 = vadd.f32 %v656, %v676
      %v678 = vrot.slane %v677, 2
      %v679 = vadd.f32 %v677, %v678
      %v680 = vrot.slane %v679, 1
      %v681 = vadd.f32 %v679, %v680
      %v682 = vrot.slane %v658, 4
      %v683 = vadd.f32 %v658, %v682
      %v684 = vrot.slane %v683, 2
      %v685 = vadd.f32 %v683, %v684
      %v686 = vrot.slane %v685, 1
      %v687 = vadd.f32 %v685, %v686
      %v688 = vrcp.pop %v674
      %v689 = vrcp.pop %v675
      %v690 = vmul.f32 %v674, %v688
      %v691 = vmul.f32 %v675, %v689
      %v692 = vsub.f32 2.0, %v690
      %v693 = vsub.f32 2.0, %v691
      %v694 = vmul.f32 %v688, %v692
      %v695 = vmul.f32 %v689, %v693
      %v696 = vmul.f32 %v656, %v694
      %v697 = vmul.f32 %v658, %v695
      %v698 = vmul.f32 %v681, %v694
      %v699 = vmul.f32 %v687, %v695
      %v700 = vsub.f32 1.0, %v698
      %v701 = vsub.f32 1.0, %v699
      %702 = vst [vmem:[%s251] sm:$0xf] %v696
      %703 = vst [vmem:[%s251 + $0x8] sm:$0xf] %v697
      %v706 = vcombine.low %v700, %v701
      %v708 = vunpack.c.l.s4 1966171168
      %v709 = vunpack.c.0.s8 %v708
      %v710 = vlaneseq
      %v711 = vshrl.u32 %v710, 7
      %v712 = vsub.s32 %v709, %v711
      %v713 = vrot.slane %v706, %v712
      %v715 = vunpack.c.l.s4 1966171168
      %v716 = vunpack.c.0.s8 %v715
      %v717 = vlaneseq
      %v718 = vshrl.u32 %v717, 7
      %v719 = vsub.s32 %v716, %v718
      %v720 = vrot.slane %v713, %v719
      %v722 = vlaneseq
      %vm723 = vcmp.ge.s32.totalorder %v722, 0
      %vm724 = vcmp.lt.s32.totalorder %v722, 256
      %vm725 = vmand %vm723, %vm724
      %s726 = scalar_lea.vmem %s251, 4
      %727 = vst.msk [vmem:[%s726] ss:$8 sm:$0x3] %vm725, %v720
      %728 = vst.msk [vmem:[%s726] ss:$8 sm:$0x0] %vm725, %v720
      %v731 = vrot.slane %v696, 7
      %v732 = vrot.slane %v697, 7
      %735 = vst [vmem:[%s251] sm:$0xe0] %v731
      %736 = vst [vmem:[%s251 + $0x8] sm:$0xe0] %v732
      %737 = vst [vmem:[%s251 + $0x10] sm:$0x1] %v731
      %738 = vst [vmem:[%s251 + $0x18] sm:$0x1] %v732
      %p739 = scmp.lt.s32.totalorder %s17, 1
      %s740 = scalar_select %p739, %s17, 1
      %s741 = smul.addr %s740, 4
      %s742 = smul.addr %s741, 8
      %s743 = scalar_lea.vmem %s6, %s742
      // Predicated region
      $region45: #{gen_kernel_forward.1} parent=43 // pred_check
        %p744 = pneg %p166
      $region46: #{gen_kernel_forward.1} parent=43 // pred_check_branch
        %746 = sbr.rel (%p744) target = $region48
      $region47: #{gen_kernel_forward.1} parent=43 // pred_region
        _
      $region48: #{gen_kernel_forward.1} parent=43 // pred_fallthru
        _
    $region44: #{gen_kernel_forward.1} parent=5 // pred_fallthru
      _
    %p747 = scmp.le.s32.totalorder 2, %s12
    // Predicated region
    $region49: #{gen_kernel_forward.1} parent=5 // pred_check
      %p748 = pneg %p747
    $region50: #{gen_kernel_forward.1} parent=5 // pred_check_branch
      %750 = sbr.rel (%p748) target = $region52
    $region51: #{gen_kernel_forward.1} parent=5 // pred_region
      %s751 = ssub.s32 %s12, 2
      // Predicated region
      $region53: #{gen_kernel_forward.1} parent=51 // pred_check
        %p752 = pneg %p172
      $region54: #{gen_kernel_forward.1} parent=51 // pred_check_branch
        %754 = sbr.rel (%p752) target = $region56
      $region55: #{gen_kernel_forward.1} parent=51 // pred_region
        %p755 = scmp.lt.s32.totalorder %s18, 1
        %s756 = scalar_select %p755, %s18, 1
        %s757 = smul.addr %s756, 4
        %s758 = smul.addr %s757, 8
        %s759 = scalar_lea.vmem %s6, %s758
      $region56: #{gen_kernel_forward.1} parent=51 // pred_fallthru
        _
    $region52: #{gen_kernel_forward.1} parent=5 // pred_fallthru
      _
  $region6: #{gen_kernel_forward.1} parent=0 // loop_footer
    %s16 = sadd.s32 1, %s12
  $region7: #{gen_kernel_forward.1} parent=0 // loop_footer_branch
    %11 = sbr.rel target = $region3
  $region8: #{gen_kernel_forward.1} parent=0 // loop_exit
    _

</llo_original>
